<compile_context>
chip_gen: v5e
topology: v5e:2x2
jax: 0.10.0
libtpu: 0.0.40
codegen_flags: <defaults>
</compile_context>

<pallas_src>
import functools

import jax
import jax.numpy as jnp
from jax.experimental import pallas as pl
from jax.experimental.pallas import tpu as pltpu


def _round_up(x, m):
    return (x + m - 1) // m * m


def _pick_epilogue_dtype():
    """bf16 epilogue on chips with a bf16 VPU (v6e/v7x), f32 otherwise (v5e/...)."""
    try:
        kind = jax.devices()[0].device_kind.lower()
    except Exception:  # pragma: no cover - CPU/interpret fallbacks
        return jnp.float32
    if "v6" in kind or "v7" in kind:
        return jnp.bfloat16
    return jnp.float32


# ---------------------------------------------------------------------------
# Kernel
# ---------------------------------------------------------------------------
def _ffn_kernel(*refs, n_layers, n_last, epi_dtype):
    """Fused FFN: (Linear + ReLU) x (n_layers-1) -> Linear.

    refs = (x_ref, w0_ref, b0_ref, ..., w{L-1}_ref, b{L-1}_ref, o_ref)
      x_ref : [tm, K0p]   bf16 activation tile (lane-dense, zero-padded)
      wj    : [Kjp, Njp]  bf16 weight (zero-padded, resident across the grid)
      bj    : [1,  Njp]   bias row in the epilogue dtype (zero-padded)
      o_ref : [tm, N_last] unpadded output tile (masked store when N_last<128)
    """
    x_ref = refs[0]
    o_ref = refs[-1]
    wb = refs[1:-1]

    h = x_ref[...]                               # bf16, straight into the MXU
    for j in range(n_layers):
        w = wb[2 * j][...]                       # bf16
        b = wb[2 * j + 1][...]                   # epi_dtype, broadcasts over tm
        # MXU matmul in bf16 with f32 accumulation; epilogue in epi_dtype.
        y = jnp.dot(h, w, preferred_element_type=jnp.float32).astype(epi_dtype)
        y = y + b
        if j < n_layers - 1:
            y = jnp.maximum(y, 0)                # ReLU
            h = y.astype(jnp.bfloat16)           # next layer's MXU input
        else:
            h = y                                # Identity output activation
    # Zero padding is exact, so only the first n_last columns carry data.
    # TODO(synk): for wide hidden layers (>=512 at tm=128) chunk each layer's
    # N into 128/256-wide slices to bound vreg pressure (not needed here).
    o_ref[...] = h[:, :n_last].astype(o_ref.dtype)


# ---------------------------------------------------------------------------
# Forward (traced under jax.jit by make_ffn)
# ---------------------------------------------------------------------------
def _ffn_forward(x, packed, *, sizes, padded, tile_m, epi_dtype):
    B = x.shape[0]
    out_dtype = x.dtype
    n_layers = len(sizes) - 1
    n_last = sizes[-1]
    k0p = padded[0]

    # Batch tile: full (8-aligned) batch for small batches, else tile_m rows.
    tm = min(tile_m, _round_up(B, 8))
    B_pad = _round_up(B, tm)

    # Pad + cast x to bf16 once (fused inside the jit): halves activation DMA.
    x_pad = (jnp.zeros((B_pad, k0p), jnp.bfloat16)
             .at[:B, :sizes[0]].set(x.astype(jnp.bfloat16)))

    in_specs = [pl.BlockSpec((tm, k0p), lambda i: (i, 0))]
    for j in range(n_layers):
        kp, np_ = padded[j], padded[j + 1]
        # Constant index_map -> weights/bias stay resident across the batch grid.
        # TODO(synk): single-buffer these (pl.Buffered(1)) and/or add a K/N-tiled
        # f32-accumulator path once total bf16 weights approach ~40 MiB (v7x) /
        # ~90 MiB (v5e/v6e); irrelevant at these sizes.
        in_specs += [
            pl.BlockSpec((kp, np_), lambda i: (0, 0)),
            pl.BlockSpec((1, np_), lambda i: (0, 0)),
        ]

    # VMEM budget: only override the default when the resident footprint needs
    # it; derive the cap from the chip instead of hard-coding 64 MiB.
    weight_bytes = sum(int(p.size) * p.dtype.itemsize for p in packed)
    tile_bytes = tm * k0p * 2 + tm * n_last * x.dtype.itemsize
    need = 2 * weight_bytes + 2 * tile_bytes + (4 << 20)
    vmem_limit = None
    if need > (16 << 20):
        try:
            cap = int(pltpu.get_tpu_info().vmem_capacity_bytes)
        except Exception:  # pragma: no cover
            cap = 64 << 20
        vmem_limit = min(need, cap * 3 // 4)

    kernel = functools.partial(
        _ffn_kernel, n_layers=n_layers, n_last=n_last, epi_dtype=epi_dtype)

    out = pl.pallas_call(
        kernel,
        out_shape=jax.ShapeDtypeStruct((B_pad, n_last), out_dtype),
        grid=(B_pad // tm,),
        in_specs=in_specs,
        out_specs=pl.BlockSpec((tm, n_last), lambda i: (i, 0)),
        compiler_params=pltpu.CompilerParams(
            dimension_semantics=("parallel",),   # shards grid steps across TCs
            vmem_limit_bytes=vmem_limit,
        ),
    )(x_pad, *packed)

    return out if B_pad == B else out[:B]


# ---------------------------------------------------------------------------
# One-time param pre-pack + jitted closure
# ---------------------------------------------------------------------------
def pack_ffn_params(params, in_dim, epi_dtype):
    """Pad weights/biases to lane-dense 128 multiples and cast once (not per call).

    Zero padding is exact: padded x-cols / W-rows / W-cols and padded bias
    entries contribute 0, and ReLU(0) = 0.
    """
    sizes = (in_dim,) + tuple(w.shape[1] for (w, _) in params)
    padded = tuple(_round_up(s, 128) for s in sizes)
    packed = []
    for j, (w, b) in enumerate(params):
        kj, nj = w.shape
        kp, np_ = padded[j], padded[j + 1]
        w_pad = (jnp.zeros((kp, np_), jnp.bfloat16)
                 .at[:kj, :nj].set(w.astype(jnp.bfloat16)))
        b_pad = (jnp.zeros((1, np_), epi_dtype)
                 .at[:, :nj].set(b.astype(epi_dtype)))
        packed += [w_pad, b_pad]
    return tuple(packed), sizes, padded


def make_ffn(params, in_dim, *, tile_m=128):
    """Pre-pack params once and return a jitted FFN forward: x -> y."""
    epi_dtype = _pick_epilogue_dtype()
    packed, sizes, padded = pack_ffn_params(params, in_dim, epi_dtype)
    fwd = jax.jit(functools.partial(
        _ffn_forward, sizes=sizes, padded=padded, tile_m=tile_m,
        epi_dtype=epi_dtype))
    return lambda x: fwd(x, packed), epi_dtype


def init_ffn_params(sizes, key):
    """Deterministic init mimicking nn.Linear's U(-1/sqrt(fan_in), 1/sqrt(fan_in))."""
    params = []
    for j in range(len(sizes) - 1):
        fan_in, fan_out = sizes[j], sizes[j + 1]
        key, kw, kb = jax.random.split(key, 3)
        bound = 1.0 / jnp.sqrt(fan_in)
        # Stored as [in, out] (transposed vs. PyTorch's [out, in]) for x @ W.
        w = jax.random.uniform(kw, (fan_in, fan_out), jnp.float32, -bound, bound)
        b = jax.random.uniform(kb, (1, fan_out), jnp.float32, -bound, bound)
        params.append((w, b))
    return params


# ---------------------------------------------------------------------------
# References
# ---------------------------------------------------------------------------
def _reference_recipe(x, params, epi_dtype):
    """Plain-JAX reference following the kernel's bf16-MXU / epi_dtype recipe."""
    h = x.astype(jnp.bfloat16)
    for j, (w, b) in enumerate(params):
        y = jnp.dot(h, w.astype(jnp.bfloat16),
                    preferred_element_type=jnp.float32).astype(epi_dtype)
        y = y + b.astype(epi_dtype)
        if j < len(params) - 1:
            y = jnp.maximum(y, 0)
            h = y.astype(jnp.bfloat16)
        else:
            h = y
    return h.astype(jnp.float32)


def _reference_f32(x, params):
    h = x
    for j, (w, b) in enumerate(params):
        h = h @ w + b
        if j < len(params) - 1:
            h = jnp.maximum(h, 0.0)
    return h


if __name__ == "__main__":
    # TODO(synk): batch_norm=True variant (nn.BatchNorm1d) not implemented;
    # the default FFN(..., batch_norm=False) forward path is reproduced.
    key = jax.random.PRNGKey(0)
    sizes = (32, 64, 64, 8)          # FFN(sizes=[32, 64, 64, 8])
    batch = 16

    key, kx = jax.random.split(key)
    x = jax.random.normal(kx, (batch, sizes[0]), jnp.float32)
    params = init_ffn_params(sizes, key)

    ffn, epi_dtype = make_ffn(params, sizes[0])
    out = ffn(x)
    jax.block_until_ready(out)

    assert out.shape == (batch, sizes[-1])
    # Tight check vs. a reference that follows the exact kernel recipe.
    ref_tight = _reference_recipe(x, params, epi_dtype)
    assert jnp.allclose(out, ref_tight, atol=1e-2, rtol=1e-2)
    # Loose check vs. pure-f32 math (bf16 rounding only).
    ref_f32 = _reference_f32(x, params)
    assert jnp.allclose(out, ref_f32, atol=5e-2, rtol=5e-2)

    print("KERNEL_OK")
</pallas_src>

<mosaic_0001>
module attributes {stable_mosaic.version = 11 : i64} {
  func.func @_ffn_kernel(%arg0: i32, %arg1: memref<16x128xbf16, #tpu.memory_space<vmem>>, %arg2: memref<128x128xbf16, #tpu.memory_space<vmem>>, %arg3: memref<1x128xf32, #tpu.memory_space<vmem>>, %arg4: memref<128x128xbf16, #tpu.memory_space<vmem>>, %arg5: memref<1x128xf32, #tpu.memory_space<vmem>>, %arg6: memref<128x128xbf16, #tpu.memory_space<vmem>>, %arg7: memref<1x128xf32, #tpu.memory_space<vmem>>, %arg8: memref<16x8xf32, #tpu.memory_space<vmem>>) attributes {dimension_semantics = [#tpu.dimension_semantics<parallel>], iteration_bounds = array<i64: 1>, scalar_prefetch = 0 : i64, scratch_operands = 0 : i64, tpu.core_type = #tpu.core_type<tc>, window_params = [{transform_indices = @transform_0, window_bounds = array<i64: 16, 128>}, {pipeline_mode = #tpu.pipeline_mode<synchronous>, transform_indices = @transform_1, window_bounds = array<i64: 128, 128>}, {pipeline_mode = #tpu.pipeline_mode<synchronous>, transform_indices = @transform_2, window_bounds = array<i64: 1, 128>}, {pipeline_mode = #tpu.pipeline_mode<synchronous>, transform_indices = @transform_3, window_bounds = array<i64: 128, 128>}, {pipeline_mode = #tpu.pipeline_mode<synchronous>, transform_indices = @transform_4, window_bounds = array<i64: 1, 128>}, {pipeline_mode = #tpu.pipeline_mode<synchronous>, transform_indices = @transform_5, window_bounds = array<i64: 128, 128>}, {pipeline_mode = #tpu.pipeline_mode<synchronous>, transform_indices = @transform_6, window_bounds = array<i64: 1, 128>}, {transform_indices = @transform_7, window_bounds = array<i64: 16, 8>}]} {
    %c0 = arith.constant 0 : index
    %c0_0 = arith.constant 0 : index
    %0 = vector.load %arg1[%c0, %c0_0] : memref<16x128xbf16, #tpu.memory_space<vmem>>, vector<16x128xbf16>
    %c0_1 = arith.constant 0 : index
    %c0_2 = arith.constant 0 : index
    %1 = vector.load %arg2[%c0_1, %c0_2] : memref<128x128xbf16, #tpu.memory_space<vmem>>, vector<128x128xbf16>
    %c0_3 = arith.constant 0 : index
    %c0_4 = arith.constant 0 : index
    %2 = vector.load %arg3[%c0_3, %c0_4] : memref<1x128xf32, #tpu.memory_space<vmem>>, vector<1x128xf32>
    %cst = arith.constant dense<0.000000e+00> : vector<16x128xf32>
    %3 = tpu.matmul %0, %1, %cst {dimension_numbers = #tpu.dot_dimension_numbers<[1], [0], [0], [1], [0, 0, 1, 1], [], []>} : vector<16x128xbf16>, vector<128x128xbf16>, vector<16x128xf32> -> vector<16x128xf32>
    %4 = vector.broadcast %2 : vector<1x128xf32> to vector<16x128xf32>
    %5 = arith.addf %3, %4 : vector<16x128xf32>
    %cst_5 = arith.constant 0.000000e+00 : f32
    %6 = vector.broadcast %cst_5 : f32 to vector<16x128xf32>
    %7 = arith.maximumf %5, %6 : vector<16x128xf32>
    %8 = arith.truncf %7 : vector<16x128xf32> to vector<16x128xbf16>
    %c0_6 = arith.constant 0 : index
    %c0_7 = arith.constant 0 : index
    %9 = vector.load %arg4[%c0_6, %c0_7] : memref<128x128xbf16, #tpu.memory_space<vmem>>, vector<128x128xbf16>
    %c0_8 = arith.constant 0 : index
    %c0_9 = arith.constant 0 : index
    %10 = vector.load %arg5[%c0_8, %c0_9] : memref<1x128xf32, #tpu.memory_space<vmem>>, vector<1x128xf32>
    %cst_10 = arith.constant dense<0.000000e+00> : vector<16x128xf32>
    %11 = tpu.matmul %8, %9, %cst_10 {dimension_numbers = #tpu.dot_dimension_numbers<[1], [0], [0], [1], [0, 0, 1, 1], [], []>} : vector<16x128xbf16>, vector<128x128xbf16>, vector<16x128xf32> -> vector<16x128xf32>
    %12 = vector.broadcast %10 : vector<1x128xf32> to vector<16x128xf32>
    %13 = arith.addf %11, %12 : vector<16x128xf32>
    %cst_11 = arith.constant 0.000000e+00 : f32
    %14 = vector.broadcast %cst_11 : f32 to vector<16x128xf32>
    %15 = arith.maximumf %13, %14 : vector<16x128xf32>
    %16 = arith.truncf %15 : vector<16x128xf32> to vector<16x128xbf16>
    %c0_12 = arith.constant 0 : index
    %c0_13 = arith.constant 0 : index
    %17 = vector.load %arg6[%c0_12, %c0_13] : memref<128x128xbf16, #tpu.memory_space<vmem>>, vector<128x128xbf16>
    %c0_14 = arith.constant 0 : index
    %c0_15 = arith.constant 0 : index
    %18 = vector.load %arg7[%c0_14, %c0_15] : memref<1x128xf32, #tpu.memory_space<vmem>>, vector<1x128xf32>
    %cst_16 = arith.constant dense<0.000000e+00> : vector<16x128xf32>
    %19 = tpu.matmul %16, %17, %cst_16 {dimension_numbers = #tpu.dot_dimension_numbers<[1], [0], [0], [1], [0, 0, 1, 1], [], []>} : vector<16x128xbf16>, vector<128x128xbf16>, vector<16x128xf32> -> vector<16x128xf32>
    %20 = vector.broadcast %18 : vector<1x128xf32> to vector<16x128xf32>
    %21 = arith.addf %19, %20 : vector<16x128xf32>
    %22 = vector.extract_strided_slice %21 {offsets = [0, 0], sizes = [16, 8], strides = [1, 1]} : vector<16x128xf32> to vector<16x8xf32>
    %c0_17 = arith.constant 0 : index
    %c0_18 = arith.constant 0 : index
    %23 = vector.load %arg8[%c0_17, %c0_18] : memref<16x8xf32, #tpu.memory_space<vmem>>, vector<16x8xf32>
    tpu.vector_store %arg8[%c0_17, %c0_18], %22 {strides = array<i32>} : memref<16x8xf32, #tpu.memory_space<vmem>>, vector<16x8xf32>,
    return
  }
  func.func @transform_0(%arg0: i32) -> (i32, i32) {
    %c0_i32 = arith.constant 0 : i32
    %c0_i32_0 = arith.constant 0 : i32
    return %arg0, %c0_i32 : i32, i32
  }
  func.func @transform_1(%arg0: i32) -> (i32, i32) {
    %c0_i32 = arith.constant 0 : i32
    %c0_i32_0 = arith.constant 0 : i32
    %c0_i32_1 = arith.constant 0 : i32
    return %c0_i32, %c0_i32_0 : i32, i32
  }
  func.func @transform_2(%arg0: i32) -> (i32, i32) {
    %c0_i32 = arith.constant 0 : i32
    %c0_i32_0 = arith.constant 0 : i32
    %c0_i32_1 = arith.constant 0 : i32
    return %c0_i32, %c0_i32_0 : i32, i32
  }
  func.func @transform_3(%arg0: i32) -> (i32, i32) {
    %c0_i32 = arith.constant 0 : i32
    %c0_i32_0 = arith.constant 0 : i32
    %c0_i32_1 = arith.constant 0 : i32
    return %c0_i32, %c0_i32_0 : i32, i32
  }
  func.func @transform_4(%arg0: i32) -> (i32, i32) {
    %c0_i32 = arith.constant 0 : i32
    %c0_i32_0 = arith.constant 0 : i32
    %c0_i32_1 = arith.constant 0 : i32
    return %c0_i32, %c0_i32_0 : i32, i32
  }
  func.func @transform_5(%arg0: i32) -> (i32, i32) {
    %c0_i32 = arith.constant 0 : i32
    %c0_i32_0 = arith.constant 0 : i32
    %c0_i32_1 = arith.constant 0 : i32
    return %c0_i32, %c0_i32_0 : i32, i32
  }
  func.func @transform_6(%arg0: i32) -> (i32, i32) {
    %c0_i32 = arith.constant 0 : i32
    %c0_i32_0 = arith.constant 0 : i32
    %c0_i32_1 = arith.constant 0 : i32
    return %c0_i32, %c0_i32_0 : i32, i32
  }
  func.func @transform_7(%arg0: i32) -> (i32, i32) {
    %c0_i32 = arith.constant 0 : i32
    %c0_i32_0 = arith.constant 0 : i32
    return %arg0, %c0_i32 : i32, i32
  }
}

</mosaic_0001>

<llo_original>
// kernel: _ffn_forward.1
$region0: #{_ffn_forward.1}
  #allocation0 [shape = 'u32[]', space=smem, size = 0x4, offset = 0x4, fixed_abs, tag = 'smem constant byte address 0x4 - core index']
  #allocation1 [shape = 'u32[72,128]{1,0:T(1,128)}', space=vmem, size = 0x9000, scoped, tag = 'internal scratch']
  %s0 = inlined_call_operand.vmem [shape: bf16[16,128], index: 0, kind: input, shape index: {}]
  %s1 = inlined_call_operand.hbm [shape: bf16[128,128], index: 1, kind: input, shape index: {}]
  %s2 = inlined_call_operand.vmem [shape: f32[1,128], index: 2, kind: input, shape index: {}]
  %s3 = inlined_call_operand.hbm [shape: bf16[128,128], index: 3, kind: input, shape index: {}]
  %s4 = inlined_call_operand.vmem [shape: f32[1,128], index: 4, kind: input, shape index: {}]
  %s5 = inlined_call_operand.hbm [shape: bf16[128,128], index: 5, kind: input, shape index: {}]
  %s6 = inlined_call_operand.vmem [shape: f32[1,128], index: 6, kind: input, shape index: {}]
  %s7 = inlined_call_operand.vmem [shape: f32[16,8], index: 7, kind: output, shape index: {}]
  %s8 = sld [smem:[#allocation0]]
  $region50: #{_ffn_forward.1} parent=0
    _
  %s10 = ssub.s32 1, %s8
  %s11 = scalar_select 0, %s10, %s8
  $region1: #{_ffn_forward.1} parent=0
    #allocation2 [shape = 'u8[32768]{0}', space=vmem, size = 0x8000, scoped, tag = 'input window, operand 1, single buffered']
    #allocation3 [shape = 's32[1]{0}', space=sflag, size = 0x4, scoped, tag = 'scoped memory for _ffn_forward.1']
    #allocation4 [shape = 'u8[32768]{0}', space=vmem, size = 0x8000, scoped, tag = 'input window, operand 3, single buffered']
    #allocation5 [shape = 's32[1]{0}', space=sflag, size = 0x4, scoped, tag = 'scoped memory for _ffn_forward.1']
    #allocation6 [shape = 'u8[32768]{0}', space=vmem, size = 0x8000, scoped, tag = 'input window, operand 5, single buffered']
    %12 = vsyncpa [#allocation3], 0
    %13 = vsyncpa [#allocation5], 0
    // Predicated region
    $region2: #{_ffn_forward.1} parent=1 // pred_check
      _
    $region3: #{_ffn_forward.1} parent=1 // pred_check_branch
      %15 = sbr.rel (0) target = $region5
    $region4: #{_ffn_forward.1} parent=1 // pred_region
      _
    $region5: #{_ffn_forward.1} parent=1 // pred_fallthru
      _
    // Predicated region
    $region6: #{_ffn_forward.1} parent=1 // pred_check
      _
    $region7: #{_ffn_forward.1} parent=1 // pred_check_branch
      %17 = sbr.rel (0) target = $region9
    $region8: #{_ffn_forward.1} parent=1 // pred_region
      %19 = vsyncadd [#allocation3], 0
      %s20 = sshll.u32 %s1, 4
      %s21 = int_to_ptr.hbm [resolvable:$true] %s20
      %s22 = sshll.u32 [#allocation2], 4
      %s23 = int_to_ptr.vmem [resolvable:$true] %s22
      %28 = dma.hbm_to_vmem [thread:$0]  %s21, 1024, %s23, [#allocation3], 64, 64, 4
    $region9: #{_ffn_forward.1} parent=1 // pred_fallthru
      _
    // Predicated region
    $region10: #{_ffn_forward.1} parent=1 // pred_check
      _
    $region11: #{_ffn_forward.1} parent=1 // pred_check_branch
      %30 = sbr.rel (0) target = $region13
    $region12: #{_ffn_forward.1} parent=1 // pred_region
      _
    $region13: #{_ffn_forward.1} parent=1 // pred_fallthru
      _
    // Predicated region
    $region14: #{_ffn_forward.1} parent=1 // pred_check
      _
    $region15: #{_ffn_forward.1} parent=1 // pred_check_branch
      %32 = sbr.rel (0) target = $region17
    $region16: #{_ffn_forward.1} parent=1 // pred_region
      %34 = vsyncadd [#allocation5], 0
      %s35 = sshll.u32 %s3, 4
      %s36 = int_to_ptr.hbm [resolvable:$true] %s35
      %s37 = sshll.u32 [#allocation4], 4
      %s38 = int_to_ptr.vmem [resolvable:$true] %s37
      %43 = dma.hbm_to_vmem [thread:$0]  %s36, 1024, %s38, [#allocation5], 64, 64, 4
    $region17: #{_ffn_forward.1} parent=1 // pred_fallthru
      _
    // Predicated region
    $region18: #{_ffn_forward.1} parent=1 // pred_check
      _
    $region19: #{_ffn_forward.1} parent=1 // pred_check_branch
      %45 = sbr.rel (0) target = $region21
    $region20: #{_ffn_forward.1} parent=1 // pred_region
      _
    $region21: #{_ffn_forward.1} parent=1 // pred_fallthru
      _
    // Predicated region
    $region22: #{_ffn_forward.1} parent=1 // pred_check
      _
    $region23: #{_ffn_forward.1} parent=1 // pred_check_branch
      %47 = sbr.rel (0) target = $region25
    $region24: #{_ffn_forward.1} parent=1 // pred_region
      %49 = vsyncadd [#allocation5], 0
      %s50 = sshll.u32 %s5, 4
      %s51 = int_to_ptr.hbm [resolvable:$true] %s50
      %s52 = sshll.u32 [#allocation6], 4
      %s53 = int_to_ptr.vmem [resolvable:$true] %s52
      %58 = dma.hbm_to_vmem [thread:$0]  %s51, 1024, %s53, [#allocation5], 64, 64, 4
    $region25: #{_ffn_forward.1} parent=1 // pred_fallthru
      _
    // Predicated region
    $region26: #{_ffn_forward.1} parent=1 // pred_check
      _
    $region27: #{_ffn_forward.1} parent=1 // pred_check_branch
      %60 = sbr.rel (0) target = $region29
    $region28: #{_ffn_forward.1} parent=1 // pred_region
      _
    $region29: #{_ffn_forward.1} parent=1 // pred_fallthru
      _
    // Predicated region
    $region30: #{_ffn_forward.1} parent=1 // pred_check
      _
    $region31: #{_ffn_forward.1} parent=1 // pred_check_branch
      %62 = sbr.rel (0) target = $region33
    $region32: #{_ffn_forward.1} parent=1 // pred_region
      %64 = dma.done [#allocation3], 1024
    $region33: #{_ffn_forward.1} parent=1 // pred_fallthru
      _
    // Predicated region
    $region34: #{_ffn_forward.1} parent=1 // pred_check
      _
    $region35: #{_ffn_forward.1} parent=1 // pred_check_branch
      %66 = sbr.rel (0) target = $region37
    $region36: #{_ffn_forward.1} parent=1 // pred_region
      %68 = dma.done [#allocation5], 1024
    $region37: #{_ffn_forward.1} parent=1 // pred_fallthru
      _
    // Predicated region
    $region38: #{_ffn_forward.1} parent=1 // pred_check
      _
    $region39: #{_ffn_forward.1} parent=1 // pred_check_branch
      %70 = sbr.rel (0) target = $region41
    $region40: #{_ffn_forward.1} parent=1 // pred_region
      %72 = dma.done [#allocation5], 1024
    $region41: #{_ffn_forward.1} parent=1 // pred_fallthru
      _
    %v73 = vld [vmem:[%s0] sm:$0xf]
    %v74 = vld [vmem:[%s0 + $0x4] sm:$0xf]
    %v75 = vld [vmem:[#allocation2] sm:$0xf]
    %v76 = vld [vmem:[#allocation2 + $0x4] sm:$0xf]
    %v77 = vld [vmem:[#allocation2 + $0x8] sm:$0xf]
    %v78 = vld [vmem:[#allocation2 + $0xc] sm:$0xf]
    %v79 = vld [vmem:[#allocation2 + $0x10] sm:$0xf]
    %v80 = vld [vmem:[#allocation2 + $0x14] sm:$0xf]
    %v81 = vld [vmem:[#allocation2 + $0x18] sm:$0xf]
    %v82 = vld [vmem:[#allocation2 + $0x1c] sm:$0xf]
    %v83 = vld [vmem:[#allocation2 + $0x20] sm:$0xf]
    %v84 = vld [vmem:[#allocation2 + $0x24] sm:$0xf]
    %v85 = vld [vmem:[#allocation2 + $0x28] sm:$0xf]
    %v86 = vld [vmem:[#allocation2 + $0x2c] sm:$0xf]
    %v87 = vld [vmem:[#allocation2 + $0x30] sm:$0xf]
    %v88 = vld [vmem:[#allocation2 + $0x34] sm:$0xf]
    %v89 = vld [vmem:[#allocation2 + $0x38] sm:$0xf]
    %v90 = vld [vmem:[#allocation2 + $0x3c] sm:$0xf]
    %v91 = vld [vmem:[%s2] sm:$0x1]
    %v93 = vperm.slane %v91, 0
    %v97 = vunpack.c.l.b16 %v73
    %v98 = vunpack.c.l.b16 %v74
    %v99 = vpack.c.b16 %v98, %v97
    %v117 = vunpack.c.l.b16 %v75
    %v118 = vunpack.c.l.b16 %v76
    %v119 = vunpack.c.l.b16 %v77
    %v120 = vunpack.c.l.b16 %v78
    %v121 = vunpack.c.l.b16 %v79
    %v122 = vunpack.c.l.b16 %v80
    %v123 = vunpack.c.l.b16 %v81
    %v124 = vunpack.c.l.b16 %v82
    %v125 = vunpack.c.l.b16 %v83
    %v126 = vunpack.c.l.b16 %v84
    %v127 = vunpack.c.l.b16 %v85
    %v128 = vunpack.c.l.b16 %v86
    %v129 = vunpack.c.l.b16 %v87
    %v130 = vunpack.c.l.b16 %v88
    %v131 = vunpack.c.l.b16 %v89
    %v132 = vunpack.c.l.b16 %v90
    %v133 = vpack.c.b16 %v118, %v117
    %v134 = vpack.c.b16 %v120, %v119
    %v135 = vpack.c.b16 %v122, %v121
    %v136 = vpack.c.b16 %v124, %v123
    %v137 = vpack.c.b16 %v126, %v125
    %v138 = vpack.c.b16 %v128, %v127
    %v139 = vpack.c.b16 %v130, %v129
    %v140 = vpack.c.b16 %v132, %v131
    %149 = vmatpush.bf16.msra.mxu0 %v140
    %150 = vmatpush.bf16.msra.mxu0 %v139
    %151 = vmatpush.bf16.msra.mxu0 %v138
    %152 = vmatpush.bf16.msra.mxu0 %v137
    %153 = vmatpush.bf16.msra.mxu0 %v136
    %154 = vmatpush.bf16.msra.mxu0 %v135
    %155 = vmatpush.bf16.msra.mxu0 %v134
    %156 = vmatpush.bf16.msra.mxu0 %v133
    %157 = vmatmul.bf16.gmra.mxu0 %v99
    %v158 = vpop.f32.mrf.mxu0
    %v159 = vadd.f32 %v93, %v158
    %v160 = vpop.f32.mrf.mxu0
    %v161 = vadd.f32 %v93, %v160
    %162 = vdwg.mxu0
    %v163 = vmax.f32 %v159, 0.0
    %v164 = vmax.f32 %v161, 0.0
    %v165 = vpack.c.bf16 %v164, %v163
    %v166 = vld [vmem:[#allocation4] sm:$0xf]
    %v167 = vld [vmem:[#allocation4 + $0x4] sm:$0xf]
    %v168 = vld [vmem:[#allocation4 + $0x8] sm:$0xf]
    %v169 = vld [vmem:[#allocation4 + $0xc] sm:$0xf]
    %v170 = vld [vmem:[#allocation4 + $0x10] sm:$0xf]
    %v171 = vld [vmem:[#allocation4 + $0x14] sm:$0xf]
    %v172 = vld [vmem:[#allocation4 + $0x18] sm:$0xf]
    %v173 = vld [vmem:[#allocation4 + $0x1c] sm:$0xf]
    %v174 = vld [vmem:[#allocation4 + $0x20] sm:$0xf]
    %v175 = vld [vmem:[#allocation4 + $0x24] sm:$0xf]
    %v176 = vld [vmem:[#allocation4 + $0x28] sm:$0xf]
    %v177 = vld [vmem:[#allocation4 + $0x2c] sm:$0xf]
    %v178 = vld [vmem:[#allocation4 + $0x30] sm:$0xf]
    %v179 = vld [vmem:[#allocation4 + $0x34] sm:$0xf]
    %v180 = vld [vmem:[#allocation4 + $0x38] sm:$0xf]
    %v181 = vld [vmem:[#allocation4 + $0x3c] sm:$0xf]
    %v182 = vld [vmem:[%s4] sm:$0x1]
    %v184 = vperm.slane %v182, 0
    %v202 = vunpack.c.l.b16 %v166
    %v203 = vunpack.c.l.b16 %v167
    %v204 = vunpack.c.l.b16 %v168
    %v205 = vunpack.c.l.b16 %v169
    %v206 = vunpack.c.l.b16 %v170
    %v207 = vunpack.c.l.b16 %v171
    %v208 = vunpack.c.l.b16 %v172
    %v209 = vunpack.c.l.b16 %v173
    %v210 = vunpack.c.l.b16 %v174
    %v211 = vunpack.c.l.b16 %v175
    %v212 = vunpack.c.l.b16 %v176
    %v213 = vunpack.c.l.b16 %v177
    %v214 = vunpack.c.l.b16 %v178
    %v215 = vunpack.c.l.b16 %v179
    %v216 = vunpack.c.l.b16 %v180
    %v217 = vunpack.c.l.b16 %v181
    %v218 = vpack.c.b16 %v203, %v202
    %v219 = vpack.c.b16 %v205, %v204
    %v220 = vpack.c.b16 %v207, %v206
    %v221 = vpack.c.b16 %v209, %v208
    %v222 = vpack.c.b16 %v211, %v210
    %v223 = vpack.c.b16 %v213, %v212
    %v224 = vpack.c.b16 %v215, %v214
    %v225 = vpack.c.b16 %v217, %v216
    %234 = vmatpush.bf16.msra.mxu0 %v225
    %235 = vmatpush.bf16.msra.mxu0 %v224
    %236 = vmatpush.bf16.msra.mxu0 %v223
    %237 = vmatpush.bf16.msra.mxu0 %v222
    %238 = vmatpush.bf16.msra.mxu0 %v221
    %239 = vmatpush.bf16.msra.mxu0 %v220
    %240 = vmatpush.bf16.msra.mxu0 %v219
    %241 = vmatpush.bf16.msra.mxu0 %v218
    %242 = vmatmul.bf16.gmra.mxu0 %v165
    %v243 = vpop.f32.mrf.mxu0
    %v244 = vadd.f32 %v184, %v243
    %v245 = vpop.f32.mrf.mxu0
    %v246 = vadd.f32 %v184, %v245
    %247 = vdwg.mxu0
    %v248 = vmax.f32 %v244, 0.0
    %v249 = vmax.f32 %v246, 0.0
    %v250 = vpack.c.bf16 %v249, %v248
    %v251 = vld [vmem:[#allocation6] sm:$0xf]
    %v252 = vld [vmem:[#allocation6 + $0x4] sm:$0xf]
    %v253 = vld [vmem:[#allocation6 + $0x8] sm:$0xf]
    %v254 = vld [vmem:[#allocation6 + $0xc] sm:$0xf]
    %v255 = vld [vmem:[#allocation6 + $0x10] sm:$0xf]
    %v256 = vld [vmem:[#allocation6 + $0x14] sm:$0xf]
    %v257 = vld [vmem:[#allocation6 + $0x18] sm:$0xf]
    %v258 = vld [vmem:[#allocation6 + $0x1c] sm:$0xf]
    %v259 = vld [vmem:[#allocation6 + $0x20] sm:$0xf]
    %v260 = vld [vmem:[#allocation6 + $0x24] sm:$0xf]
    %v261 = vld [vmem:[#allocation6 + $0x28] sm:$0xf]
    %v262 = vld [vmem:[#allocation6 + $0x2c] sm:$0xf]
    %v263 = vld [vmem:[#allocation6 + $0x30] sm:$0xf]
    %v264 = vld [vmem:[#allocation6 + $0x34] sm:$0xf]
    %v265 = vld [vmem:[#allocation6 + $0x38] sm:$0xf]
    %v266 = vld [vmem:[#allocation6 + $0x3c] sm:$0xf]
    %v267 = vld [vmem:[%s6] sm:$0x1]
    %v269 = vperm.slane %v267, 0
    %v287 = vunpack.c.l.b16 %v251
    %v288 = vunpack.c.l.b16 %v252
    %v289 = vunpack.c.l.b16 %v253
    %v290 = vunpack.c.l.b16 %v254
    %v291 = vunpack.c.l.b16 %v255
    %v292 = vunpack.c.l.b16 %v256
    %v293 = vunpack.c.l.b16 %v257
    %v294 = vunpack.c.l.b16 %v258
    %v295 = vunpack.c.l.b16 %v259
    %v296 = vunpack.c.l.b16 %v260
    %v297 = vunpack.c.l.b16 %v261
    %v298 = vunpack.c.l.b16 %v262
    %v299 = vunpack.c.l.b16 %v263
    %v300 = vunpack.c.l.b16 %v264
    %v301 = vunpack.c.l.b16 %v265
    %v302 = vunpack.c.l.b16 %v266
    %v303 = vpack.c.b16 %v288, %v287
    %v304 = vpack.c.b16 %v290, %v289
    %v305 = vpack.c.b16 %v292, %v291
    %v306 = vpack.c.b16 %v294, %v293
    %v307 = vpack.c.b16 %v296, %v295
    %v308 = vpack.c.b16 %v298, %v297
    %v309 = vpack.c.b16 %v300, %v299
    %v310 = vpack.c.b16 %v302, %v301
    %319 = vmatpush.bf16.msra.mxu0 %v310
    %320 = vmatpush.bf16.msra.mxu0 %v309
    %321 = vmatpush.bf16.msra.mxu0 %v308
    %322 = vmatpush.bf16.msra.mxu0 %v307
    %323 = vmatpush.bf16.msra.mxu0 %v306
    %324 = vmatpush.bf16.msra.mxu0 %v305
    %325 = vmatpush.bf16.msra.mxu0 %v304
    %326 = vmatpush.bf16.msra.mxu0 %v303
    %327 = vmatmul.bf16.gmra.mxu0 %v250
    %v328 = vpop.f32.mrf.mxu0
    %v329 = vadd.f32 %v269, %v328
    %v330 = vpop.f32.mrf.mxu0
    %v331 = vadd.f32 %v269, %v330
    %332 = vdwg.mxu0
    %vm333 = vcmask 64512
    %334 = vst.msk [vmem:[%s7] sm:$0xff] %vm333, %v329
    %335 = vst.msk [vmem:[%s7 + $0x8] sm:$0xff] %vm333, %v331
    // Predicated region
    $region42: #{_ffn_forward.1} parent=1 // pred_check
      _
    $region43: #{_ffn_forward.1} parent=1 // pred_check_branch
      %337 = sbr.rel (0) target = $region45
    $region44: #{_ffn_forward.1} parent=1 // pred_region
      _
    $region45: #{_ffn_forward.1} parent=1 // pred_fallthru
      _
    // Predicated region
    $region46: #{_ffn_forward.1} parent=1 // pred_check
      _
    $region47: #{_ffn_forward.1} parent=1 // pred_check_branch
      %339 = sbr.rel (0) target = $region49
    $region48: #{_ffn_forward.1} parent=1 // pred_region
      _
    $region49: #{_ffn_forward.1} parent=1 // pred_fallthru
      _
    %340 = vsyncpa [#allocation3], 1
    %341 = vsyncpa [#allocation5], 1

</llo_original>
